<compile_context>
chip_gen: v7x
topology: tpu7x:2x2x1
jax: 0.10.0
libtpu: 0.0.40
codegen_flags: <defaults>
</compile_context>

<pallas_src>
import math

import jax
import jax.numpy as jnp
from jax import lax
from jax.experimental import pallas as pl
from jax.experimental.pallas import tpu as pltpu

# ---------------- config (small shapes consistent with the module) -----------
B = 8                      # batch (== TPU sublane count: rows stay dense)
C, H, W = 3, 16, 16
PATCH = 4
N_PATCH = (H // PATCH) * (W // PATCH)     # 16 patches
PATCH_DIM = C * PATCH * PATCH             # 48
D = 32                     # opt['model']['dim']
D_HID = 4 * D              # CLIP visual mlp hidden dim (== 128, lane-dense)
L = 8                      # text sequence length
V = 64                     # vocab size
MARGIN = 0.2               # opt['loss']['margin']
LOGIT_SCALE_EXP = 1.0 / 0.07              # CLIP logit_scale.exp() (fixed)

LANE = 128                 # TPU lane width; all feature dims zero-padded to this
N_WEIGHTS = 4              # patch stem, visual mlp w1, visual mlp w2, text_projection
LOSS_COL = LANE - 1        # column of the output slab holding the scalar loss


# ---------------- fused Pallas kernel (entire forward hot path) ---------------

def _fused_forward_kernel(act_ref,      # [16, 128] f32: rows 0:8 pooled image, rows 8:16 pooled text
                          w_ref,        # [128, 4*128] bf16: patch_w | mlp_w1 | mlp_w2 | text_proj
                          b_ref,        # [8, 128] f32: rows 0..2 = patch_b, mlp_b1, mlp_b2
                          out_ref,      # [8, 128] f32: sim in cols 0:B, loss at (0, 127)
                          txt_pad_ref): # [128, 128] f32 VMEM scratch
    f32 = jnp.float32
    bf16 = jnp.bfloat16

    def w(k):  # static, lane-tile-aligned slice of the packed weight slab
        return w_ref[:, k * LANE:(k + 1) * LANE]

    imgp = act_ref[0:B, :]          # pooled patches     [8, 128]
    txtp = act_ref[B:2 * B, :]      # pooled tokens      [8, 128]

    # ----- image branch: pooled patches -> stem -> visual MLP (QuickGELU) -----
    # bf16 matmul inputs (MXU-native on v5e/v6e/v7x), f32 accumulate + elementwise.
    x = jnp.dot(imgp.astype(bf16), w(0), preferred_element_type=f32) + b_ref[0:1, :]
    h = jnp.dot(x.astype(bf16), w(1), preferred_element_type=f32) + b_ref[1:2, :]
    h = h * jax.nn.sigmoid(1.702 * h)            # CLIP QuickGELU (EUP path)
    img = jnp.dot(h.astype(bf16), w(2), preferred_element_type=f32) + b_ref[2:3, :]

    # ----- text branch: only the B real rows are projected / normalized -------
    txt = jnp.dot(txtp.astype(bf16), w(3), preferred_element_type=f32)

    # ----- L2 normalize (torch.F.normalize semantics: x / max(||x||, eps)) ----
    img_n = img / jnp.maximum(jnp.sqrt(jnp.sum(img * img, -1, keepdims=True)), 1e-12)
    txt_n = txt / jnp.maximum(jnp.sqrt(jnp.sum(txt * txt, -1, keepdims=True)), 1e-12)

    # Pad txt_n 8 -> 128 rows via tile-aligned VMEM scratch stores so the sim
    # matmul emits one lane-dense [8, 128] tile (padded rows are exact zeros).
    txt_pad_ref[...] = jnp.zeros((LANE, LANE), f32)
    txt_pad_ref[0:B, :] = txt_n

    # cosine similarity (f32: this is the user-visible output; it is tiny).
    scores = lax.dot_general(img_n, txt_pad_ref[...], (((1,), (1,)), ((), ())),
                             preferred_element_type=f32)          # [8, 128]
    # The module passes clip(...)'s output (logit-scaled sim) straight into
    # calc_triple_loss, so the loss is computed on the scaled scores.
    scores = scores * f32(LOGIT_SCALE_EXP)

    # ----- calc_triple_loss(sim, margin): bidirectional hinge ranking loss ----
    row = lax.broadcasted_iota(jnp.int32, scores.shape, 0)
    col = lax.broadcasted_iota(jnp.int32, scores.shape, 1)
    diag = row == col                 # diagonal of the valid BxB block
    valid = col < B                   # padded text columns excluded from loss
    d_col = jnp.sum(jnp.where(diag, scores, 0.0), axis=1, keepdims=True)  # [8, 1]
    d_row = jnp.sum(jnp.where(diag, scores, 0.0), axis=0, keepdims=True)  # [1, 128]
    margin = f32(MARGIN)
    cost_s = jnp.maximum(margin + scores - d_col, 0.0)    # image -> text
    cost_im = jnp.maximum(margin + scores - d_row, 0.0)   # text -> image
    keep = jnp.logical_and(valid, jnp.logical_not(diag))
    loss = (jnp.sum(jnp.where(keep, cost_s, 0.0))
            + jnp.sum(jnp.where(keep, cost_im, 0.0)))

    # ----- lane-dense output slab, one full-width unmasked store ---------------
    # padded score columns are exact zeros, so just add the loss at (0, 127).
    out_ref[...] = scores + jnp.where(
        jnp.logical_and(row == 0, col == LOSS_COL), loss, 0.0)


def _cost_estimate():
    mm_flops = 2 * B * LANE * LANE * 5          # 4 weight matmuls + sim matmul
    elt_flops = 40 * B * LANE                   # gelu / norm / loss elementwise
    bytes_accessed = (2 * B * LANE * 4          # activation slab (f32)
                      + LANE * N_WEIGHTS * LANE * 2   # weight slab (bf16)
                      + 8 * LANE * 4            # bias slab (f32)
                      + B * LANE * 4)           # output slab (f32)
    return pl.CostEstimate(flops=mm_flops + elt_flops,
                           transcendentals=B * LANE + 4 * B,
                           bytes_accessed=bytes_accessed)


_VMEM_SPEC = pl.BlockSpec(memory_space=pltpu.MemorySpace.VMEM)


def fused_forward(params, act_slab):
    slab = pl.pallas_call(
        _fused_forward_kernel,
        out_shape=jax.ShapeDtypeStruct((B, LANE), jnp.float32),
        in_specs=[_VMEM_SPEC, _VMEM_SPEC, _VMEM_SPEC],
        out_specs=_VMEM_SPEC,
        scratch_shapes=[pltpu.VMEM((LANE, LANE), jnp.float32)],
        cost_estimate=_cost_estimate(),
    )(act_slab, params["w_slab"], params["b_slab"])
    sim = slab[:, :B]
    total_loss = slab[0, LOSS_COL]
    return sim, total_loss


# ---------------- parameters (deterministic synthetic init, packed slabs) -----

def init_params(key):
    ks = jax.random.split(key, 8)

    def dense(k, fan_in, shape):
        return jax.random.normal(k, shape, jnp.float32) / math.sqrt(fan_in)

    # logical (unpadded) parameters
    patch_w = dense(ks[0], PATCH_DIM, (PATCH_DIM, D))        # synthetic visual stem
    mlp_w1 = dense(ks[1], D, (D, D_HID))                     # image_global_proj = clip.visual.mlp
    mlp_w2 = dense(ks[2], D_HID, (D_HID, D))
    text_proj = dense(ks[3], D, (D, D))                      # text_global_proj = clip.text_projection
    patch_b = 0.01 * jax.random.normal(ks[4], (D,), jnp.float32)
    mlp_b1 = 0.01 * jax.random.normal(ks[5], (D_HID,), jnp.float32)
    mlp_b2 = 0.01 * jax.random.normal(ks[6], (D,), jnp.float32)
    tok_emb = 0.02 * jax.random.normal(ks[7], (V, D), jnp.float32)

    # Pack the four projection matrices into ONE lane-aligned bf16 slab and the
    # three biases into ONE f32 [8,128] slab: 2 weight DMAs instead of 7, and
    # bf16 halves weight bytes / MXU passes. Zero padding keeps the math exact.
    w_slab = jnp.zeros((LANE, N_WEIGHTS * LANE), jnp.float32)
    w_slab = w_slab.at[:PATCH_DIM, 0 * LANE:0 * LANE + D].set(patch_w)
    w_slab = w_slab.at[:D, 1 * LANE:1 * LANE + D_HID].set(mlp_w1)
    w_slab = w_slab.at[:D_HID, 2 * LANE:2 * LANE + D].set(mlp_w2)
    w_slab = w_slab.at[:D, 3 * LANE:3 * LANE + D].set(text_proj)
    w_slab = w_slab.astype(jnp.bfloat16)

    b_slab = jnp.zeros((8, LANE), jnp.float32)
    b_slab = b_slab.at[0, :D].set(patch_b)
    b_slab = b_slab.at[1, :D_HID].set(mlp_b1)
    b_slab = b_slab.at[2, :D].set(mlp_b2)

    return {"w_slab": w_slab, "b_slab": b_slab, "tok_emb": tok_emb}


# ---------------- XLA glue (tiny gather / patchify / pooling) -----------------

def _build_act_slab(params, images, text, attn_mask):
    # patchify NCHW -> [B, N_PATCH, C*ph*pw], then mean-pool over patches.
    # mean(X) @ W + b == mean(X @ W + b): pooling before the projection is
    # exact and cuts the patch matmul rows from B*N_PATCH down to B.
    b = images.shape[0]
    p = images.reshape(b, C, H // PATCH, PATCH, W // PATCH, PATCH)
    p = p.transpose(0, 2, 4, 1, 3, 5).reshape(b, N_PATCH, PATCH_DIM)
    img_pooled = p.mean(axis=1)                               # [B, PATCH_DIM]

    # token-embedding gather + masked mean-pool (data-dependent gather stays
    # in XLA; not a Pallas-friendly access pattern at this size).
    emb = jnp.take(params["tok_emb"], text, axis=0)           # [B, L, D]
    mask = attn_mask.astype(jnp.float32)[..., None]
    txt_pooled = (emb * mask).sum(axis=1) / jnp.maximum(mask.sum(axis=1), 1.0)

    # one [16, 128] activation slab: rows 0:8 image, rows 8:16 text.
    act = jnp.zeros((2 * B, LANE), jnp.float32)
    act = act.at[:B, :PATCH_DIM].set(img_pooled)
    act = act.at[B:, :D].set(txt_pooled)
    return act


@jax.jit
def base_register_forward(params, images, text, attn_mask):
    act = _build_act_slab(params, images, text, attn_mask)
    sim, total_loss = fused_forward(params, act)
    return {"total loss": total_loss, "sim": sim}


# ---------------- demo --------------------------------------------------------

if __name__ == "__main__":
    key = jax.random.PRNGKey(0)
    kp, ki, kt = jax.random.split(key, 3)

    params = init_params(kp)
    images = jax.random.normal(ki, (B, C, H, W), jnp.float32)
    text = jax.random.randint(kt, (B, L), 0, V)
    lengths = jnp.arange(B, dtype=jnp.int32) % L + 1
    attn_mask = (jnp.arange(L)[None, :] < lengths[:, None]).astype(jnp.int32)

    out = base_register_forward(params, images, text, attn_mask)
    jax.block_until_ready(out)

    assert out["sim"].shape == (B, B)
    assert out["total loss"].shape == ()
    assert bool(jnp.isfinite(out["total loss"]))
    assert bool(jnp.all(jnp.isfinite(out["sim"])))
    print("KERNEL_OK")
</pallas_src>

<mosaic_0001>
module attributes {stable_mosaic.version = 11 : i64} {
  func.func @_fused_forward_kernel(%arg0: memref<16x128xf32, #tpu.memory_space<vmem>>, %arg1: memref<128x512xbf16, #tpu.memory_space<vmem>>, %arg2: memref<8x128xf32, #tpu.memory_space<vmem>>, %arg3: memref<8x128xf32, #tpu.memory_space<vmem>>, %arg4: memref<128x128xf32, #tpu.memory_space<vmem>>) attributes {dimension_semantics = [], scalar_prefetch = 0 : i64, scratch_operands = 1 : i64, tpu.core_type = #tpu.core_type<tc>} {
    %c0 = arith.constant 0 : index
    %c0_0 = arith.constant 0 : index
    %0 = vector.load %arg0[%c0, %c0_0] : memref<16x128xf32, #tpu.memory_space<vmem>>, vector<8x128xf32>
    %c8 = arith.constant 8 : index
    %c0_1 = arith.constant 0 : index
    %1 = vector.load %arg0[%c8, %c0_1] : memref<16x128xf32, #tpu.memory_space<vmem>>, vector<8x128xf32>
    %2 = arith.truncf %0 : vector<8x128xf32> to vector<8x128xbf16>
    %c0_2 = arith.constant 0 : index
    %c0_3 = arith.constant 0 : index
    %3 = vector.load %arg1[%c0_2, %c0_3] : memref<128x512xbf16, #tpu.memory_space<vmem>>, vector<128x128xbf16>
    %cst = arith.constant dense<0.000000e+00> : vector<8x128xf32>
    %4 = tpu.matmul %2, %3, %cst {dimension_numbers = #tpu.dot_dimension_numbers<[1], [0], [0], [1], [0, 0, 1, 1], [], []>} : vector<8x128xbf16>, vector<128x128xbf16>, vector<8x128xf32> -> vector<8x128xf32>
    %c0_4 = arith.constant 0 : index
    %c0_5 = arith.constant 0 : index
    %5 = vector.load %arg2[%c0_4, %c0_5] : memref<8x128xf32, #tpu.memory_space<vmem>>, vector<1x128xf32>
    %6 = vector.broadcast %5 : vector<1x128xf32> to vector<8x128xf32>
    %7 = arith.addf %4, %6 : vector<8x128xf32>
    %8 = arith.truncf %7 : vector<8x128xf32> to vector<8x128xbf16>
    %c0_6 = arith.constant 0 : index
    %c128 = arith.constant 128 : index
    %9 = vector.load %arg1[%c0_6, %c128] : memref<128x512xbf16, #tpu.memory_space<vmem>>, vector<128x128xbf16>
    %cst_7 = arith.constant dense<0.000000e+00> : vector<8x128xf32>
    %10 = tpu.matmul %8, %9, %cst_7 {dimension_numbers = #tpu.dot_dimension_numbers<[1], [0], [0], [1], [0, 0, 1, 1], [], []>} : vector<8x128xbf16>, vector<128x128xbf16>, vector<8x128xf32> -> vector<8x128xf32>
    %c1 = arith.constant 1 : index
    %c0_8 = arith.constant 0 : index
    %11 = vector.load %arg2[%c1, %c0_8] : memref<8x128xf32, #tpu.memory_space<vmem>>, vector<1x128xf32>
    %12 = vector.broadcast %11 : vector<1x128xf32> to vector<8x128xf32>
    %13 = arith.addf %10, %12 : vector<8x128xf32>
    %cst_9 = arith.constant 1.702000e+00 : f32
    %14 = vector.broadcast %cst_9 : f32 to vector<8x128xf32>
    %15 = arith.mulf %14, %13 : vector<8x128xf32>
    %16 = arith.negf %15 : vector<8x128xf32>
    %17 = math.exp %16 : vector<8x128xf32>
    %cst_10 = arith.constant 1.000000e+00 : f32
    %18 = vector.broadcast %cst_10 : f32 to vector<8x128xf32>
    %19 = arith.addf %18, %17 : vector<8x128xf32>
    %20 = arith.divf %18, %19 : vector<8x128xf32>
    %21 = arith.mulf %13, %20 : vector<8x128xf32>
    %22 = arith.truncf %21 : vector<8x128xf32> to vector<8x128xbf16>
    %c0_11 = arith.constant 0 : index
    %c256 = arith.constant 256 : index
    %23 = vector.load %arg1[%c0_11, %c256] : memref<128x512xbf16, #tpu.memory_space<vmem>>, vector<128x128xbf16>
    %cst_12 = arith.constant dense<0.000000e+00> : vector<8x128xf32>
    %24 = tpu.matmul %22, %23, %cst_12 {dimension_numbers = #tpu.dot_dimension_numbers<[1], [0], [0], [1], [0, 0, 1, 1], [], []>} : vector<8x128xbf16>, vector<128x128xbf16>, vector<8x128xf32> -> vector<8x128xf32>
    %c2 = arith.constant 2 : index
    %c0_13 = arith.constant 0 : index
    %25 = vector.load %arg2[%c2, %c0_13] : memref<8x128xf32, #tpu.memory_space<vmem>>, vector<1x128xf32>
    %26 = vector.broadcast %25 : vector<1x128xf32> to vector<8x128xf32>
    %27 = arith.addf %24, %26 : vector<8x128xf32>
    %28 = arith.truncf %1 : vector<8x128xf32> to vector<8x128xbf16>
    %c0_14 = arith.constant 0 : index
    %c384 = arith.constant 384 : index
    %29 = vector.load %arg1[%c0_14, %c384] : memref<128x512xbf16, #tpu.memory_space<vmem>>, vector<128x128xbf16>
    %cst_15 = arith.constant dense<0.000000e+00> : vector<8x128xf32>
    %30 = tpu.matmul %28, %29, %cst_15 {dimension_numbers = #tpu.dot_dimension_numbers<[1], [0], [0], [1], [0, 0, 1, 1], [], []>} : vector<8x128xbf16>, vector<128x128xbf16>, vector<8x128xf32> -> vector<8x128xf32>
    %31 = arith.mulf %27, %27 : vector<8x128xf32>
    %cst_16 = arith.constant dense<0.000000e+00> : vector<8xf32>
    %32 = vector.multi_reduction <add>, %31, %cst_16 [1] : vector<8x128xf32> to vector<8xf32>
    %33 = vector.shape_cast %32 : vector<8xf32> to vector<8x1xf32>
    %34 = math.sqrt %33 : vector<8x1xf32>
    %cst_17 = arith.constant 9.99999996E-13 : f32
    %35 = vector.broadcast %cst_17 : f32 to vector<8x1xf32>
    %36 = arith.maximumf %34, %35 : vector<8x1xf32>
    %37 = vector.broadcast %36 : vector<8x1xf32> to vector<8x128xf32>
    %38 = arith.divf %27, %37 : vector<8x128xf32>
    %39 = arith.mulf %30, %30 : vector<8x128xf32>
    %cst_18 = arith.constant dense<0.000000e+00> : vector<8xf32>
    %40 = vector.multi_reduction <add>, %39, %cst_18 [1] : vector<8x128xf32> to vector<8xf32>
    %41 = vector.shape_cast %40 : vector<8xf32> to vector<8x1xf32>
    %42 = math.sqrt %41 : vector<8x1xf32>
    %cst_19 = arith.constant 9.99999996E-13 : f32
    %43 = vector.broadcast %cst_19 : f32 to vector<8x1xf32>
    %44 = arith.maximumf %42, %43 : vector<8x1xf32>
    %45 = vector.broadcast %44 : vector<8x1xf32> to vector<8x128xf32>
    %46 = arith.divf %30, %45 : vector<8x128xf32>
    %cst_20 = arith.constant 0.000000e+00 : f32
    %47 = vector.broadcast %cst_20 : f32 to vector<128x128xf32>
    %c0_21 = arith.constant 0 : index
    %c0_22 = arith.constant 0 : index
    %48 = vector.load %arg4[%c0_21, %c0_22] : memref<128x128xf32, #tpu.memory_space<vmem>>, vector<128x128xf32>
    tpu.vector_store %arg4[%c0_21, %c0_22], %47 {strides = array<i32>} : memref<128x128xf32, #tpu.memory_space<vmem>>, vector<128x128xf32>,
    %c0_23 = arith.constant 0 : index
    %c0_24 = arith.constant 0 : index
    %49 = vector.load %arg4[%c0_23, %c0_24] : memref<128x128xf32, #tpu.memory_space<vmem>>, vector<8x128xf32>
    tpu.vector_store %arg4[%c0_23, %c0_24], %46 {strides = array<i32>} : memref<128x128xf32, #tpu.memory_space<vmem>>, vector<8x128xf32>,
    %c0_25 = arith.constant 0 : index
    %c0_26 = arith.constant 0 : index
    %50 = vector.load %arg4[%c0_25, %c0_26] : memref<128x128xf32, #tpu.memory_space<vmem>>, vector<128x128xf32>
    %cst_27 = arith.constant dense<0.000000e+00> : vector<8x128xf32>
    %51 = tpu.matmul %38, %50, %cst_27 {dimension_numbers = #tpu.dot_dimension_numbers<[1], [1], [0], [0], [0, 0, 1, 0], [], []>} : vector<8x128xf32>, vector<128x128xf32>, vector<8x128xf32> -> vector<8x128xf32>
    %cst_28 = arith.constant 14.2857141 : f32
    %52 = vector.broadcast %cst_28 : f32 to vector<8x128xf32>
    %53 = arith.mulf %51, %52 : vector<8x128xf32>
    %54 = tpu.iota {dimensions = array<i32: 0>} : vector<8x128xi32>
    %55 = tpu.iota {dimensions = array<i32: 1>} : vector<8x128xi32>
    %56 = arith.cmpi eq, %54, %55 : vector<8x128xi32>
    %c8_i32 = arith.constant 8 : i32
    %57 = vector.broadcast %c8_i32 : i32 to vector<8x128xi32>
    %58 = arith.cmpi slt, %55, %57 : vector<8x128xi32>
    %cst_29 = arith.constant 0.000000e+00 : f32
    %59 = vector.broadcast %cst_29 : f32 to vector<8x128xf32>
    %60 = arith.select %56, %53, %59 : vector<8x128xi1>, vector<8x128xf32>
    %cst_30 = arith.constant dense<0.000000e+00> : vector<8xf32>
    %61 = vector.multi_reduction <add>, %60, %cst_30 [1] : vector<8x128xf32> to vector<8xf32>
    %62 = vector.shape_cast %61 : vector<8xf32> to vector<8x1xf32>
    %cst_31 = arith.constant 0.000000e+00 : f32
    %63 = vector.broadcast %cst_31 : f32 to vector<8x128xf32>
    %64 = arith.select %56, %53, %63 : vector<8x128xi1>, vector<8x128xf32>
    %cst_32 = arith.constant dense<0.000000e+00> : vector<128xf32>
    %65 = vector.multi_reduction <add>, %64, %cst_32 [0] : vector<8x128xf32> to vector<128xf32>
    %66 = vector.shape_cast %65 : vector<128xf32> to vector<1x128xf32>
    %cst_33 = arith.constant 2.000000e-01 : f32
    %67 = vector.broadcast %cst_33 : f32 to vector<8x128xf32>
    %68 = arith.addf %67, %53 : vector<8x128xf32>
    %69 = vector.broadcast %62 : vector<8x1xf32> to vector<8x128xf32>
    %70 = arith.subf %68, %69 : vector<8x128xf32>
    %cst_34 = arith.constant 0.000000e+00 : f32
    %71 = vector.broadcast %cst_34 : f32 to vector<8x128xf32>
    %72 = arith.maximumf %70, %71 : vector<8x128xf32>
    %cst_35 = arith.constant 2.000000e-01 : f32
    %73 = vector.broadcast %cst_35 : f32 to vector<8x128xf32>
    %74 = arith.addf %73, %53 : vector<8x128xf32>
    %75 = vector.broadcast %66 : vector<1x128xf32> to vector<8x128xf32>
    %76 = arith.subf %74, %75 : vector<8x128xf32>
    %cst_36 = arith.constant 0.000000e+00 : f32
    %77 = vector.broadcast %cst_36 : f32 to vector<8x128xf32>
    %78 = arith.maximumf %76, %77 : vector<8x128xf32>
    %cst_37 = arith.constant dense<true> : vector<8x128xi1>
    %79 = arith.xori %56, %cst_37 : vector<8x128xi1>
    %80 = arith.andi %58, %79 : vector<8x128xi1>
    %cst_38 = arith.constant 0.000000e+00 : f32
    %81 = vector.broadcast %cst_38 : f32 to vector<8x128xf32>
    %82 = arith.select %80, %72, %81 : vector<8x128xi1>, vector<8x128xf32>
    %83 = vector.shape_cast %82 : vector<8x128xf32> to vector<1x8x128xf32>
    %cst_39 = arith.constant dense<0.000000e+00> : vector<1xf32>
    %84 = vector.multi_reduction <add>, %83, %cst_39 [1, 2] : vector<1x8x128xf32> to vector<1xf32>
    %85 = vector.shape_cast %84 : vector<1xf32> to vector<1x1x1xf32>
    %86 = vector.extract %85[0, 0, 0] : f32 from vector<1x1x1xf32>
    %cst_40 = arith.constant 0.000000e+00 : f32
    %87 = vector.broadcast %cst_40 : f32 to vector<8x128xf32>
    %88 = arith.select %80, %78, %87 : vector<8x128xi1>, vector<8x128xf32>
    %89 = vector.shape_cast %88 : vector<8x128xf32> to vector<1x8x128xf32>
    %cst_41 = arith.constant dense<0.000000e+00> : vector<1xf32>
    %90 = vector.multi_reduction <add>, %89, %cst_41 [1, 2] : vector<1x8x128xf32> to vector<1xf32>
    %91 = vector.shape_cast %90 : vector<1xf32> to vector<1x1x1xf32>
    %92 = vector.extract %91[0, 0, 0] : f32 from vector<1x1x1xf32>
    %93 = arith.addf %86, %92 : f32
    %c0_i32 = arith.constant 0 : i32
    %94 = vector.broadcast %c0_i32 : i32 to vector<8x128xi32>
    %95 = arith.cmpi eq, %54, %94 : vector<8x128xi32>
    %c127_i32 = arith.constant 127 : i32
    %96 = vector.broadcast %c127_i32 : i32 to vector<8x128xi32>
    %97 = arith.cmpi eq, %55, %96 : vector<8x128xi32>
    %98 = arith.andi %95, %97 : vector<8x128xi1>
    %cst_42 = arith.constant 0.000000e+00 : f32
    %99 = vector.broadcast %93 : f32 to vector<8x128xf32>
    %100 = vector.broadcast %cst_42 : f32 to vector<8x128xf32>
    %101 = arith.select %98, %99, %100 : vector<8x128xi1>, vector<8x128xf32>
    %102 = arith.addf %53, %101 : vector<8x128xf32>
    %c0_43 = arith.constant 0 : index
    %c0_44 = arith.constant 0 : index
    %103 = vector.load %arg3[%c0_43, %c0_44] : memref<8x128xf32, #tpu.memory_space<vmem>>, vector<8x128xf32>
    tpu.vector_store %arg3[%c0_43, %c0_44], %102 {strides = array<i32>} : memref<8x128xf32, #tpu.memory_space<vmem>>, vector<8x128xf32>,
    return
  }
}

</mosaic_0001>

<llo_original>
// kernel: base_register_forward.1
$region0: #{base_register_forward.1}
  #allocation0 [shape = 'u32[]', space=smem, size = 0x4, offset = 0x4, fixed_abs, tag = 'smem constant byte address 0x4 - core index']
  #allocation1 [shape = 'u32[144,128]{1,0:T(1,128)}', space=vmem, size = 0x12000, scoped, tag = 'internal scratch']
  #allocation2 [shape = 'f32[128,128]{1,0:T(8,128)}', space=vmem, size = 0x10000, scoped, tag = 'scratch operand']
  %s0 = inlined_call_operand.vmem [shape: f32[16,128], index: 0, kind: input, shape index: {}]
  %s1 = inlined_call_operand.vmem [shape: bf16[128,512], index: 1, kind: input, shape index: {}]
  %s2 = inlined_call_operand.vmem [shape: f32[8,128], index: 2, kind: input, shape index: {}]
  %s3 = inlined_call_operand.vmem [shape: f32[8,128], index: 3, kind: output, shape index: {}]
  %s4 = sld [smem:[#allocation0]]
  $region22: #{base_register_forward.1} parent=0
    _
  %s6 = ssub.s32 1, %s4
  %s7 = scalar_select 0, %s6, %s4
  // Predicated region
  $region2: #{base_register_forward.1} parent=0 // pred_check
    _
  $region3: #{base_register_forward.1} parent=0 // pred_check_branch
    %9 = sbr.rel (0) target = $region5
  $region4: #{base_register_forward.1} parent=0 // pred_region
    _
  $region5: #{base_register_forward.1} parent=0 // pred_fallthru
    _
  // Predicated region
  $region6: #{base_register_forward.1} parent=0 // pred_check
    _
  $region7: #{base_register_forward.1} parent=0 // pred_check_branch
    %11 = sbr.rel (0) target = $region9
  $region8: #{base_register_forward.1} parent=0 // pred_region
    _
  $region9: #{base_register_forward.1} parent=0 // pred_fallthru
    _
  // Predicated region
  $region10: #{base_register_forward.1} parent=0 // pred_check
    _
  $region11: #{base_register_forward.1} parent=0 // pred_check_branch
    %13 = sbr.rel (0) target = $region13
  $region12: #{base_register_forward.1} parent=0 // pred_region
    _
  $region13: #{base_register_forward.1} parent=0 // pred_fallthru
    _
  %v15 = vld [vmem:[%s0] sm:$0xff]
  %v16 = vld [vmem:[%s0 + $0x8] sm:$0xff]
  %v17 = vpack.c.bf16 %v15, %v15
  %v18 = vld [vmem:[%s1] sm:$0xf]
  %v19 = vld [vmem:[%s1 + $0x10] sm:$0xf]
  %v20 = vld [vmem:[%s1 + $0x20] sm:$0xf]
  %v21 = vld [vmem:[%s1 + $0x30] sm:$0xf]
  %v22 = vld [vmem:[%s1 + $0x40] sm:$0xf]
  %v23 = vld [vmem:[%s1 + $0x50] sm:$0xf]
  %v24 = vld [vmem:[%s1 + $0x60] sm:$0xf]
  %v25 = vld [vmem:[%s1 + $0x70] sm:$0xf]
  %v26 = vld [vmem:[%s1 + $0x80] sm:$0xf]
  %v27 = vld [vmem:[%s1 + $0x90] sm:$0xf]
  %v28 = vld [vmem:[%s1 + $0xa0] sm:$0xf]
  %v29 = vld [vmem:[%s1 + $0xb0] sm:$0xf]
  %v30 = vld [vmem:[%s1 + $0xc0] sm:$0xf]
  %v31 = vld [vmem:[%s1 + $0xd0] sm:$0xf]
  %v32 = vld [vmem:[%s1 + $0xe0] sm:$0xf]
  %v33 = vld [vmem:[%s1 + $0xf0] sm:$0xf]
  %v34 = vld [vmem:[%s2] sm:$0x1]
  %v35 = vlaneseq
  %v36 = vshrl.u32 %v35, 7
  %v37 = vsub.s32 0, %v36
  %v38 = vrot.slane %v34, %v37
  %v55 = vunpack.c.l.b16 %v18
  %v56 = vunpack.c.l.b16 %v19
  %v57 = vunpack.c.l.b16 %v20
  %v58 = vunpack.c.l.b16 %v21
  %v59 = vunpack.c.l.b16 %v22
  %v60 = vunpack.c.l.b16 %v23
  %v61 = vunpack.c.l.b16 %v24
  %v62 = vunpack.c.l.b16 %v25
  %v63 = vunpack.c.l.b16 %v26
  %v64 = vunpack.c.l.b16 %v27
  %v65 = vunpack.c.l.b16 %v28
  %v66 = vunpack.c.l.b16 %v29
  %v67 = vunpack.c.l.b16 %v30
  %v68 = vunpack.c.l.b16 %v31
  %v69 = vunpack.c.l.b16 %v32
  %v70 = vunpack.c.l.b16 %v33
  %v71 = vpack.c.b16 %v56, %v55
  %v72 = vpack.c.b16 %v58, %v57
  %v73 = vpack.c.b16 %v60, %v59
  %v74 = vpack.c.b16 %v62, %v61
  %v75 = vpack.c.b16 %v64, %v63
  %v76 = vpack.c.b16 %v66, %v65
  %v77 = vpack.c.b16 %v68, %v67
  %v78 = vpack.c.b16 %v70, %v69
  %87 = vmatprep.subr.bf16.mxu0 0
  %88 = vmatpush1.bf16.msra.mxu0 %v71
  %89 = vmatprep.subr.bf16.mxu0 0
  %90 = vmatpush1.bf16.msra.mxu0 %v72
  %91 = vmatprep.subr.bf16.mxu0 0
  %92 = vmatpush1.bf16.msra.mxu0 %v73
  %93 = vmatprep.subr.bf16.mxu0 0
  %94 = vmatpush1.bf16.msra.mxu0 %v74
  %95 = vmatprep.subr.bf16.mxu0 0
  %96 = vmatpush1.bf16.msra.mxu0 %v75
  %97 = vmatprep.subr.bf16.mxu0 0
  %98 = vmatpush1.bf16.msra.mxu0 %v76
  %99 = vmatprep.subr.bf16.mxu0 0
  %100 = vmatpush1.bf16.msra.mxu0 %v77
  %101 = vmatprep.subr.bf16.mxu0 0
  %102 = vmatpush1.bf16.msra.mxu0 %v78
  %103 = vmatprep.subr.bf16.mxu0 0
  %104 = vmatpush1.bf16.msra.mxu0 0
  %105 = vmatprep.subr.bf16.mxu0 0
  %106 = vmatpush1.bf16.msra.mxu0 0
  %107 = vmatprep.subr.bf16.mxu0 0
  %108 = vmatpush1.bf16.msra.mxu0 0
  %109 = vmatprep.subr.bf16.mxu0 0
  %110 = vmatpush1.bf16.msra.mxu0 0
  %111 = vmatprep.subr.bf16.mxu0 0
  %112 = vmatpush1.bf16.msra.mxu0 0
  %113 = vmatprep.subr.bf16.mxu0 0
  %114 = vmatpush1.bf16.msra.mxu0 0
  %115 = vmatprep.subr.bf16.mxu0 0
  %116 = vmatpush1.bf16.msra.mxu0 0
  %117 = vmatprep.subr.bf16.mxu0 0
  %118 = vmatpush1.bf16.msra.mxu0 0
  %119 = vmatprep.mubr.bf16.mxu0 0
  %120 = vmatmul.mubr.bf16.gmra.mrb[0].mxu0 %v17
  %v121 = vpop.f32.mrb[0].mxu0
  %v122 = vadd.f32 %v38, %v121
  %v123 = vpop.f32.mrb[0].mxu0
  %v124 = vpop.f32.mrb[0].mxu0
  %v125 = vpop.f32.mrb[0].mxu0
  %126 = vdwg.mxu0
  %v127 = vpack.c.bf16 %v122, %v122
  %v128 = vld [vmem:[%s1 + $0x4] sm:$0xf]
  %v129 = vld [vmem:[%s1 + $0x14] sm:$0xf]
  %v130 = vld [vmem:[%s1 + $0x24] sm:$0xf]
  %v131 = vld [vmem:[%s1 + $0x34] sm:$0xf]
  %v132 = vld [vmem:[%s1 + $0x44] sm:$0xf]
  %v133 = vld [vmem:[%s1 + $0x54] sm:$0xf]
  %v134 = vld [vmem:[%s1 + $0x64] sm:$0xf]
  %v135 = vld [vmem:[%s1 + $0x74] sm:$0xf]
  %v136 = vld [vmem:[%s1 + $0x84] sm:$0xf]
  %v137 = vld [vmem:[%s1 + $0x94] sm:$0xf]
  %v138 = vld [vmem:[%s1 + $0xa4] sm:$0xf]
  %v139 = vld [vmem:[%s1 + $0xb4] sm:$0xf]
  %v140 = vld [vmem:[%s1 + $0xc4] sm:$0xf]
  %v141 = vld [vmem:[%s1 + $0xd4] sm:$0xf]
  %v142 = vld [vmem:[%s1 + $0xe4] sm:$0xf]
  %v143 = vld [vmem:[%s1 + $0xf4] sm:$0xf]
  %v144 = vld [vmem:[%s2 + $0x1] sm:$0x1]
  %v145 = vlaneseq
  %v146 = vshrl.u32 %v145, 7
  %v147 = vsub.s32 0, %v146
  %v148 = vrot.slane %v144, %v147
  %v165 = vunpack.c.l.b16 %v128
  %v166 = vunpack.c.l.b16 %v129
  %v167 = vunpack.c.l.b16 %v130
  %v168 = vunpack.c.l.b16 %v131
  %v169 = vunpack.c.l.b16 %v132
  %v170 = vunpack.c.l.b16 %v133
  %v171 = vunpack.c.l.b16 %v134
  %v172 = vunpack.c.l.b16 %v135
  %v173 = vunpack.c.l.b16 %v136
  %v174 = vunpack.c.l.b16 %v137
  %v175 = vunpack.c.l.b16 %v138
  %v176 = vunpack.c.l.b16 %v139
  %v177 = vunpack.c.l.b16 %v140
  %v178 = vunpack.c.l.b16 %v141
  %v179 = vunpack.c.l.b16 %v142
  %v180 = vunpack.c.l.b16 %v143
  %v181 = vpack.c.b16 %v166, %v165
  %v182 = vpack.c.b16 %v168, %v167
  %v183 = vpack.c.b16 %v170, %v169
  %v184 = vpack.c.b16 %v172, %v171
  %v185 = vpack.c.b16 %v174, %v173
  %v186 = vpack.c.b16 %v176, %v175
  %v187 = vpack.c.b16 %v178, %v177
  %v188 = vpack.c.b16 %v180, %v179
  %197 = vmatprep.subr.bf16.mxu0 0
  %198 = vmatpush1.bf16.msra.mxu0 %v181
  %199 = vmatprep.subr.bf16.mxu0 0
  %200 = vmatpush1.bf16.msra.mxu0 %v182
  %201 = vmatprep.subr.bf16.mxu0 0
  %202 = vmatpush1.bf16.msra.mxu0 %v183
  %203 = vmatprep.subr.bf16.mxu0 0
  %204 = vmatpush1.bf16.msra.mxu0 %v184
  %205 = vmatprep.subr.bf16.mxu0 0
  %206 = vmatpush1.bf16.msra.mxu0 %v185
  %207 = vmatprep.subr.bf16.mxu0 0
  %208 = vmatpush1.bf16.msra.mxu0 %v186
  %209 = vmatprep.subr.bf16.mxu0 0
  %210 = vmatpush1.bf16.msra.mxu0 %v187
  %211 = vmatprep.subr.bf16.mxu0 0
  %212 = vmatpush1.bf16.msra.mxu0 %v188
  %213 = vmatprep.subr.bf16.mxu0 0
  %214 = vmatpush1.bf16.msra.mxu0 0
  %215 = vmatprep.subr.bf16.mxu0 0
  %216 = vmatpush1.bf16.msra.mxu0 0
  %217 = vmatprep.subr.bf16.mxu0 0
  %218 = vmatpush1.bf16.msra.mxu0 0
  %219 = vmatprep.subr.bf16.mxu0 0
  %220 = vmatpush1.bf16.msra.mxu0 0
  %221 = vmatprep.subr.bf16.mxu0 0
  %222 = vmatpush1.bf16.msra.mxu0 0
  %223 = vmatprep.subr.bf16.mxu0 0
  %224 = vmatpush1.bf16.msra.mxu0 0
  %225 = vmatprep.subr.bf16.mxu0 0
  %226 = vmatpush1.bf16.msra.mxu0 0
  %227 = vmatprep.subr.bf16.mxu0 0
  %228 = vmatpush1.bf16.msra.mxu0 0
  %229 = vmatprep.mubr.bf16.mxu0 0
  %230 = vmatmul.mubr.bf16.gmra.mrb[0].mxu0 %v127
  %v231 = vpop.f32.mrb[0].mxu0
  %v232 = vadd.f32 %v148, %v231
  %v233 = vpop.f32.mrb[0].mxu0
  %v234 = vpop.f32.mrb[0].mxu0
  %v235 = vpop.f32.mrb[0].mxu0
  %236 = vdwg.mxu0
  %v237 = vmul.f32 %v232, 1.702
  %v238 = vxor.u32 %v237, 2147483648
  %v239 = vmul.f32 %v238, 1.442695
  %v240 = vpow.pop %v239
  %v241 = vadd.f32 %v240, 1.0
  %v242 = vrcp.pop %v241
  %v243 = vmul.f32 1.0, %v242
  %v244 = vmul.f32 %v232, %v243
  %v245 = vpack.c.bf16 %v244, %v244
  %v246 = vld [vmem:[%s1 + $0x8] sm:$0xf]
  %v247 = vld [vmem:[%s1 + $0x18] sm:$0xf]
  %v248 = vld [vmem:[%s1 + $0x28] sm:$0xf]
  %v249 = vld [vmem:[%s1 + $0x38] sm:$0xf]
  %v250 = vld [vmem:[%s1 + $0x48] sm:$0xf]
  %v251 = vld [vmem:[%s1 + $0x58] sm:$0xf]
  %v252 = vld [vmem:[%s1 + $0x68] sm:$0xf]
  %v253 = vld [vmem:[%s1 + $0x78] sm:$0xf]
  %v254 = vld [vmem:[%s1 + $0x88] sm:$0xf]
  %v255 = vld [vmem:[%s1 + $0x98] sm:$0xf]
  %v256 = vld [vmem:[%s1 + $0xa8] sm:$0xf]
  %v257 = vld [vmem:[%s1 + $0xb8] sm:$0xf]
  %v258 = vld [vmem:[%s1 + $0xc8] sm:$0xf]
  %v259 = vld [vmem:[%s1 + $0xd8] sm:$0xf]
  %v260 = vld [vmem:[%s1 + $0xe8] sm:$0xf]
  %v261 = vld [vmem:[%s1 + $0xf8] sm:$0xf]
  %v262 = vld [vmem:[%s2 + $0x2] sm:$0x1]
  %v263 = vlaneseq
  %v264 = vshrl.u32 %v263, 7
  %v265 = vsub.s32 0, %v264
  %v266 = vrot.slane %v262, %v265
  %v283 = vunpack.c.l.b16 %v246
  %v284 = vunpack.c.l.b16 %v247
  %v285 = vunpack.c.l.b16 %v248
  %v286 = vunpack.c.l.b16 %v249
  %v287 = vunpack.c.l.b16 %v250
  %v288 = vunpack.c.l.b16 %v251
  %v289 = vunpack.c.l.b16 %v252
  %v290 = vunpack.c.l.b16 %v253
  %v291 = vunpack.c.l.b16 %v254
  %v292 = vunpack.c.l.b16 %v255
  %v293 = vunpack.c.l.b16 %v256
  %v294 = vunpack.c.l.b16 %v257
  %v295 = vunpack.c.l.b16 %v258
  %v296 = vunpack.c.l.b16 %v259
  %v297 = vunpack.c.l.b16 %v260
  %v298 = vunpack.c.l.b16 %v261
  %v299 = vpack.c.b16 %v284, %v283
  %v300 = vpack.c.b16 %v286, %v285
  %v301 = vpack.c.b16 %v288, %v287
  %v302 = vpack.c.b16 %v290, %v289
  %v303 = vpack.c.b16 %v292, %v291
  %v304 = vpack.c.b16 %v294, %v293
  %v305 = vpack.c.b16 %v296, %v295
  %v306 = vpack.c.b16 %v298, %v297
  %315 = vmatprep.subr.bf16.mxu0 0
  %316 = vmatpush1.bf16.msra.mxu0 %v299
  %317 = vmatprep.subr.bf16.mxu0 0
  %318 = vmatpush1.bf16.msra.mxu0 %v300
  %319 = vmatprep.subr.bf16.mxu0 0
  %320 = vmatpush1.bf16.msra.mxu0 %v301
  %321 = vmatprep.subr.bf16.mxu0 0
  %322 = vmatpush1.bf16.msra.mxu0 %v302
  %323 = vmatprep.subr.bf16.mxu0 0
  %324 = vmatpush1.bf16.msra.mxu0 %v303
  %325 = vmatprep.subr.bf16.mxu0 0
  %326 = vmatpush1.bf16.msra.mxu0 %v304
  %327 = vmatprep.subr.bf16.mxu0 0
  %328 = vmatpush1.bf16.msra.mxu0 %v305
  %329 = vmatprep.subr.bf16.mxu0 0
  %330 = vmatpush1.bf16.msra.mxu0 %v306
  %331 = vmatprep.subr.bf16.mxu0 0
  %332 = vmatpush1.bf16.msra.mxu0 0
  %333 = vmatprep.subr.bf16.mxu0 0
  %334 = vmatpush1.bf16.msra.mxu0 0
  %335 = vmatprep.subr.bf16.mxu0 0
  %336 = vmatpush1.bf16.msra.mxu0 0
  %337 = vmatprep.subr.bf16.mxu0 0
  %338 = vmatpush1.bf16.msra.mxu0 0
  %339 = vmatprep.subr.bf16.mxu0 0
  %340 = vmatpush1.bf16.msra.mxu0 0
  %341 = vmatprep.subr.bf16.mxu0 0
  %342 = vmatpush1.bf16.msra.mxu0 0
  %343 = vmatprep.subr.bf16.mxu0 0
  %344 = vmatpush1.bf16.msra.mxu0 0
  %345 = vmatprep.subr.bf16.mxu0 0
  %346 = vmatpush1.bf16.msra.mxu0 0
  %347 = vmatprep.mubr.bf16.mxu0 0
  %348 = vmatmul.mubr.bf16.gmra.mrb[0].mxu0 %v245
  %v349 = vpop.f32.mrb[0].mxu0
  %v350 = vadd.f32 %v266, %v349
  %v351 = vpop.f32.mrb[0].mxu0
  %v352 = vpop.f32.mrb[0].mxu0
  %v353 = vpop.f32.mrb[0].mxu0
  %354 = vdwg.mxu0
  %v355 = vpack.c.bf16 %v16, %v16
  %v356 = vld [vmem:[%s1 + $0xc] sm:$0xf]
  %v357 = vld [vmem:[%s1 + $0x1c] sm:$0xf]
  %v358 = vld [vmem:[%s1 + $0x2c] sm:$0xf]
  %v359 = vld [vmem:[%s1 + $0x3c] sm:$0xf]
  %v360 = vld [vmem:[%s1 + $0x4c] sm:$0xf]
  %v361 = vld [vmem:[%s1 + $0x5c] sm:$0xf]
  %v362 = vld [vmem:[%s1 + $0x6c] sm:$0xf]
  %v363 = vld [vmem:[%s1 + $0x7c] sm:$0xf]
  %v364 = vld [vmem:[%s1 + $0x8c] sm:$0xf]
  %v365 = vld [vmem:[%s1 + $0x9c] sm:$0xf]
  %v366 = vld [vmem:[%s1 + $0xac] sm:$0xf]
  %v367 = vld [vmem:[%s1 + $0xbc] sm:$0xf]
  %v368 = vld [vmem:[%s1 + $0xcc] sm:$0xf]
  %v369 = vld [vmem:[%s1 + $0xdc] sm:$0xf]
  %v370 = vld [vmem:[%s1 + $0xec] sm:$0xf]
  %v371 = vld [vmem:[%s1 + $0xfc] sm:$0xf]
  %v388 = vunpack.c.l.b16 %v356
  %v389 = vunpack.c.l.b16 %v357
  %v390 = vunpack.c.l.b16 %v358
  %v391 = vunpack.c.l.b16 %v359
  %v392 = vunpack.c.l.b16 %v360
  %v393 = vunpack.c.l.b16 %v361
  %v394 = vunpack.c.l.b16 %v362
  %v395 = vunpack.c.l.b16 %v363
  %v396 = vunpack.c.l.b16 %v364
  %v397 = vunpack.c.l.b16 %v365
  %v398 = vunpack.c.l.b16 %v366
  %v399 = vunpack.c.l.b16 %v367
  %v400 = vunpack.c.l.b16 %v368
  %v401 = vunpack.c.l.b16 %v369
  %v402 = vunpack.c.l.b16 %v370
  %v403 = vunpack.c.l.b16 %v371
  %v404 = vpack.c.b16 %v389, %v388
  %v405 = vpack.c.b16 %v391, %v390
  %v406 = vpack.c.b16 %v393, %v392
  %v407 = vpack.c.b16 %v395, %v394
  %v408 = vpack.c.b16 %v397, %v396
  %v409 = vpack.c.b16 %v399, %v398
  %v410 = vpack.c.b16 %v401, %v400
  %v411 = vpack.c.b16 %v403, %v402
  %420 = vmatprep.subr.bf16.mxu0 0
  %421 = vmatpush1.bf16.msra.mxu0 %v404
  %422 = vmatprep.subr.bf16.mxu0 0
  %423 = vmatpush1.bf16.msra.mxu0 %v405
  %424 = vmatprep.subr.bf16.mxu0 0
  %425 = vmatpush1.bf16.msra.mxu0 %v406
  %426 = vmatprep.subr.bf16.mxu0 0
  %427 = vmatpush1.bf16.msra.mxu0 %v407
  %428 = vmatprep.subr.bf16.mxu0 0
  %429 = vmatpush1.bf16.msra.mxu0 %v408
  %430 = vmatprep.subr.bf16.mxu0 0
  %431 = vmatpush1.bf16.msra.mxu0 %v409
  %432 = vmatprep.subr.bf16.mxu0 0
  %433 = vmatpush1.bf16.msra.mxu0 %v410
  %434 = vmatprep.subr.bf16.mxu0 0
  %435 = vmatpush1.bf16.msra.mxu0 %v411
  %436 = vmatprep.subr.bf16.mxu0 0
  %437 = vmatpush1.bf16.msra.mxu0 0
  %438 = vmatprep.subr.bf16.mxu0 0
  %439 = vmatpush1.bf16.msra.mxu0 0
  %440 = vmatprep.subr.bf16.mxu0 0
  %441 = vmatpush1.bf16.msra.mxu0 0
  %442 = vmatprep.subr.bf16.mxu0 0
  %443 = vmatpush1.bf16.msra.mxu0 0
  %444 = vmatprep.subr.bf16.mxu0 0
  %445 = vmatpush1.bf16.msra.mxu0 0
  %446 = vmatprep.subr.bf16.mxu0 0
  %447 = vmatpush1.bf16.msra.mxu0 0
  %448 = vmatprep.subr.bf16.mxu0 0
  %449 = vmatpush1.bf16.msra.mxu0 0
  %450 = vmatprep.subr.bf16.mxu0 0
  %451 = vmatpush1.bf16.msra.mxu0 0
  %452 = vmatprep.mubr.bf16.mxu0 0
  %453 = vmatmul.mubr.bf16.gmra.mrb[0].mxu0 %v355
  %v454 = vpop.f32.mrb[0].mxu0
  %v455 = vadd.f32 0.0, %v454
  %v456 = vpop.f32.mrb[0].mxu0
  %v457 = vpop.f32.mrb[0].mxu0
  %v458 = vpop.f32.mrb[0].mxu0
  %459 = vdwg.mxu0
  %v460 = vmul.f32 %v350, %v350
  %461 = vadd.xlane.f32.xlu0 %v460
  %v462 = vpop.xlane.xlu0 %461
  %v463 = vrsqrt.pop %v462
  %v464 = vmul.f32 %v462, %v463
  %vm465 = vcmp.eq.f32.partialorder %v462, inf
  %v466 = vsel %vm465, %v462, %v464
  %vm467 = vcmp.eq.f32.partialorder %v462, 0.0
  %v468 = vand.u32 %v462, 2147483648
  %v469 = vsel %vm467, %v468, %v466
  %v470 = vmax.f32 %v469, 1e-12
  %v471 = vrcp.pop %v470
  %v472 = vmul.f32 %v350, %v471
  %v473 = vmul.f32 %v455, %v455
  %474 = vadd.xlane.f32.xlu0 %v473
  %v475 = vpop.xlane.xlu0 %474
  %v476 = vrsqrt.pop %v475
  %v477 = vmul.f32 %v475, %v476
  %vm478 = vcmp.eq.f32.partialorder %v475, inf
  %v479 = vsel %vm478, %v475, %v477
  %vm480 = vcmp.eq.f32.partialorder %v475, 0.0
  %v481 = vand.u32 %v475, 2147483648
  %v482 = vsel %vm480, %v481, %v479
  %v483 = vmax.f32 %v482, 1e-12
  %v484 = vrcp.pop %v483
  %v485 = vmul.f32 %v455, %v484
  %486 = vst [vmem:[#allocation2] sm:$0xff] 0.0
  %487 = vst [vmem:[#allocation2 + $0x8] sm:$0xff] 0.0
  %488 = vst [vmem:[#allocation2 + $0x10] sm:$0xff] 0.0
  %489 = vst [vmem:[#allocation2 + $0x18] sm:$0xff] 0.0
  %490 = vst [vmem:[#allocation2 + $0x20] sm:$0xff] 0.0
  %491 = vst [vmem:[#allocation2 + $0x28] sm:$0xff] 0.0
  %492 = vst [vmem:[#allocation2 + $0x30] sm:$0xff] 0.0
  %493 = vst [vmem:[#allocation2 + $0x38] sm:$0xff] 0.0
  %494 = vst [vmem:[#allocation2 + $0x40] sm:$0xff] 0.0
  %495 = vst [vmem:[#allocation2 + $0x48] sm:$0xff] 0.0
  %496 = vst [vmem:[#allocation2 + $0x50] sm:$0xff] 0.0
  %497 = vst [vmem:[#allocation2 + $0x58] sm:$0xff] 0.0
  %498 = vst [vmem:[#allocation2 + $0x60] sm:$0xff] 0.0
  %499 = vst [vmem:[#allocation2 + $0x68] sm:$0xff] 0.0
  %500 = vst [vmem:[#allocation2 + $0x70] sm:$0xff] 0.0
  %501 = vst [vmem:[#allocation2 + $0x78] sm:$0xff] 0.0
  %502 = vst [vmem:[#allocation2] sm:$0xff] %v485
  %v503 = vld [vmem:[#allocation2] sm:$0xff]
  %v504 = vld [vmem:[#allocation2 + $0x8] sm:$0xff]
  %v505 = vld [vmem:[#allocation2 + $0x10] sm:$0xff]
  %v506 = vld [vmem:[#allocation2 + $0x18] sm:$0xff]
  %v507 = vld [vmem:[#allocation2 + $0x20] sm:$0xff]
  %v508 = vld [vmem:[#allocation2 + $0x28] sm:$0xff]
  %v509 = vld [vmem:[#allocation2 + $0x30] sm:$0xff]
  %v510 = vld [vmem:[#allocation2 + $0x38] sm:$0xff]
  %v511 = vld [vmem:[#allocation2 + $0x40] sm:$0xff]
  %v512 = vld [vmem:[#allocation2 + $0x48] sm:$0xff]
  %v513 = vld [vmem:[#allocation2 + $0x50] sm:$0xff]
  %v514 = vld [vmem:[#allocation2 + $0x58] sm:$0xff]
  %v515 = vld [vmem:[#allocation2 + $0x60] sm:$0xff]
  %v516 = vld [vmem:[#allocation2 + $0x68] sm:$0xff]
  %v517 = vld [vmem:[#allocation2 + $0x70] sm:$0xff]
  %v518 = vld [vmem:[#allocation2 + $0x78] sm:$0xff]
  %519 = vmatprep.subr.mxu0 0.0
  %520 = vmatpush1.xpose.msra.mxu0 %v503
  %521 = vmatprep.subr.mxu0 0.0
  %522 = vmatpush1.xpose.msra.mxu0 %v504
  %523 = vmatprep.subr.mxu0 0.0
  %524 = vmatpush1.xpose.msra.mxu0 %v505
  %525 = vmatprep.subr.mxu0 0.0
  %526 = vmatpush1.xpose.msra.mxu0 %v506
  %527 = vmatprep.subr.mxu0 0.0
  %528 = vmatpush1.xpose.msra.mxu0 %v507
  %529 = vmatprep.subr.mxu0 0.0
  %530 = vmatpush1.xpose.msra.mxu0 %v508
  %531 = vmatprep.subr.mxu0 0.0
  %532 = vmatpush1.xpose.msra.mxu0 %v509
  %533 = vmatprep.subr.mxu0 0.0
  %534 = vmatpush1.xpose.msra.mxu0 %v510
  %535 = vmatprep.subr.mxu0 0.0
  %536 = vmatpush1.xpose.msra.mxu0 %v511
  %537 = vmatprep.subr.mxu0 0.0
  %538 = vmatpush1.xpose.msra.mxu0 %v512
  %539 = vmatprep.subr.mxu0 0.0
  %540 = vmatpush1.xpose.msra.mxu0 %v513
  %541 = vmatprep.subr.mxu0 0.0
  %542 = vmatpush1.xpose.msra.mxu0 %v514
  %543 = vmatprep.subr.mxu0 0.0
  %544 = vmatpush1.xpose.msra.mxu0 %v515
  %545 = vmatprep.subr.mxu0 0.0
  %546 = vmatpush1.xpose.msra.mxu0 %v516
  %547 = vmatprep.subr.mxu0 0.0
  %548 = vmatpush1.xpose.msra.mxu0 %v517
  %549 = vmatprep.subr.mxu0 0.0
  %550 = vmatpush1.xpose.msra.mxu0 %v518
  %551 = vmatprep.subr.mxu0 0.0
  %552 = vmatpush1.xpose.msra.mxu0 0.0
  %553 = vmatprep.subr.mxu0 0.0
  %554 = vmatpush1.xpose.msra.mxu0 0.0
  %555 = vmatprep.subr.mxu0 0.0
  %556 = vmatpush1.xpose.msra.mxu0 0.0
  %557 = vmatprep.subr.mxu0 0.0
  %558 = vmatpush1.xpose.msra.mxu0 0.0
  %559 = vmatprep.subr.mxu0 0.0
  %560 = vmatpush1.xpose.msra.mxu0 0.0
  %561 = vmatprep.subr.mxu0 0.0
  %562 = vmatpush1.xpose.msra.mxu0 0.0
  %563 = vmatprep.subr.mxu0 0.0
  %564 = vmatpush1.xpose.msra.mxu0 0.0
  %565 = vmatprep.subr.mxu0 0.0
  %566 = vmatpush1.xpose.msra.mxu0 0.0
  %567 = vmatprep.subr.mxu0 0.0
  %568 = vmatpush1.xpose.msra.mxu0 0.0
  %569 = vmatprep.subr.mxu0 0.0
  %570 = vmatpush1.xpose.msra.mxu0 0.0
  %571 = vmatprep.subr.mxu0 0.0
  %572 = vmatpush1.xpose.msra.mxu0 0.0
  %573 = vmatprep.subr.mxu0 0.0
  %574 = vmatpush1.xpose.msra.mxu0 0.0
  %575 = vmatprep.subr.mxu0 0.0
  %576 = vmatpush1.xpose.msra.mxu0 0.0
  %577 = vmatprep.subr.mxu0 0.0
  %578 = vmatpush1.xpose.msra.mxu0 0.0
  %579 = vmatprep.subr.mxu0 0.0
  %580 = vmatpush1.xpose.msra.mxu0 0.0
  %581 = vmatprep.subr.mxu0 0.0
  %582 = vmatpush1.xpose.msra.mxu0 0.0
  %583 = vmatprep.mubr.f32.mxu0 0.0
  %584 = vmatmul.mubr.f32.gmra.mrb[0].mxu0 %v472
  %v585 = vpop.f32.mrb[0].mxu0
  %v586 = vadd.f32 0.0, %v585
  %v587 = vpop.f32.mrb[0].mxu0
  %588 = vdwg.mxu0
  %v589 = vmul.f32 %v586, 14.285714
  %v590 = vlaneseq
  %v591 = vshrl.u32 %v590, 7
  %v592 = vlaneseq
  %v593 = vand.u32 %v592, 127
  %vm594 = vcmp.eq.s32.totalorder %v591, %v593
  %vm595 = vcmp.lt.s32.totalorder %v593, 8
  %v596 = vsel %vm594, %v589, 0.0
  %597 = vadd.xlane.f32.xlu0 %v596
  %v598 = vpop.xlane.xlu0 %597
  %v599 = vrot.slane %v596, 4
  %v600 = vadd.f32 %v596, %v599
  %v601 = vrot.slane %v600, 2
  %v602 = vadd.f32 %v600, %v601
  %v603 = vrot.slane %v602, 1
  %v604 = vadd.f32 %v602, %v603
  %v605 = vadd.f32 %v589, 0.2
  %v606 = vsub.f32 %v605, %v598
  %v607 = vmax.f32 %v606, 0.0
  %v608 = vsub.f32 %v605, %v604
  %v609 = vmax.f32 %v608, 0.0
  %vm610 = vmxor %vm594, 1
  %vm611 = vmand %vm595, %vm610
  %v612 = vsel %vm611, %v607, 0.0
  %613 = vadd.xlane.f32.xlu0 %v612
  %v614 = vpop.xlane.xlu0 %613
  %v615 = vrot.slane %v614, 4
  %v616 = vadd.f32 %v614, %v615
  %v617 = vrot.slane %v616, 2
  %v618 = vadd.f32 %v616, %v617
  %v619 = vrot.slane %v618, 1
  %v620 = vadd.f32 %v618, %v619
  %s621 = vtos %v620
  %v622 = vsel %vm611, %v609, 0.0
  %623 = vadd.xlane.f32.xlu0 %v622
  %v624 = vpop.xlane.xlu0 %623
  %v625 = vrot.slane %v624, 4
  %v626 = vadd.f32 %v624, %v625
  %v627 = vrot.slane %v626, 2
  %v628 = vadd.f32 %v626, %v627
  %v629 = vrot.slane %v628, 1
  %v630 = vadd.f32 %v628, %v629
  %s631 = vtos %v630
  %s632 = sadd.f32 %s621, %s631
  %vm633 = vcmp.eq.s32.totalorder %v591, 0
  %vm634 = vcmp.eq.s32.totalorder %v593, 127
  %vm635 = vmand %vm633, %vm634
  %v636 = vstv %s632
  %v637 = vsel %vm635, %v636, 0.0
  %v638 = vadd.f32 %v589, %v637
  %639 = vst [vmem:[%s3] sm:$0xff] %v638
  // Predicated region
  $region14: #{base_register_forward.1} parent=0 // pred_check
    _
  $region15: #{base_register_forward.1} parent=0 // pred_check_branch
    %641 = sbr.rel (0) target = $region17
  $region16: #{base_register_forward.1} parent=0 // pred_region
    _
  $region17: #{base_register_forward.1} parent=0 // pred_fallthru
    _
  // Predicated region
  $region18: #{base_register_forward.1} parent=0 // pred_check
    _
  $region19: #{base_register_forward.1} parent=0 // pred_check_branch
    %643 = sbr.rel (0) target = $region21
  $region20: #{base_register_forward.1} parent=0 // pred_region
    _
  $region21: #{base_register_forward.1} parent=0 // pred_fallthru
    _

</llo_original>
